<compile_context>
chip_gen: v7x
topology: tpu7x:2x2x1
jax: 0.10.0
libtpu: 0.0.40
codegen_flags: <defaults>
</compile_context>

<pallas_src>
import jax
import jax.numpy as jnp
from jax import lax
from jax.experimental import pallas as pl
from jax.experimental.pallas import tpu as pltpu


def _encoder_seq_kernel(x_ref, w_ih_ref, w_hh_ref, b_ref, state0_ref,
                        state_ref, pre_ref):
    """Whole-sequence LSTM forward in one kernel invocation.

    x_ref      : VMEM (T, E)    f32  gathered embedding rows (resident)
    w_ih_ref   : VMEM (E, 4H)   f32  W_ih^T, gate cols ordered (i, f, o, g)
    w_hh_ref   : VMEM (H, 4H)   f32  W_hh^T, gate cols ordered (i, f, o, g)
    b_ref      : VMEM (1, 4H)   f32  b_ih + b_hh, same gate order
    state0_ref : VMEM (2, H)    f32  initial [h0 ; c0]
    state_ref  : VMEM (2, H)    f32  output  [hT ; cT]  (written once)
    pre_ref    : VMEM (T, 4H)   f32  scratch: batched input-projection gates
    """
    H = state_ref.shape[-1]
    T = x_ref.shape[0]

    # Prologue: one batched MXU pass for the non-recurrent half of every step.
    pre_ref[...] = (
        jnp.dot(x_ref[...], w_ih_ref[...], preferred_element_type=jnp.float32)
        + b_ref[...])

    # Hoist the (resident, step-invariant) recurrent weight load out of the loop.
    w_hh = w_hh_ref[...]

    def step(t, carry):
        h, c = carry
        # Per-step critical path: one (1,H)x(H,4H) MXU pass + elementwise.
        gates = pre_ref[pl.ds(t, 1), :] + jnp.dot(
            h, w_hh, preferred_element_type=jnp.float32)
        sig = jax.nn.sigmoid(gates)                   # one EUP pass over 4H
        i_g = sig[:, 0 * H:1 * H]
        f_g = sig[:, 1 * H:2 * H]
        o_g = sig[:, 2 * H:3 * H]
        g_g = jnp.tanh(gates[:, 3 * H:4 * H])         # tanh on H lanes only
        c_new = f_g * c + i_g * g_g
        h_new = o_g * jnp.tanh(c_new)
        return h_new, c_new

    h, c = lax.fori_loop(
        0, T, step, (state0_ref[0:1, :], state0_ref[1:2, :]), unroll=True)

    # Single unmasked store of the carried state.
    state_ref[...] = jnp.concatenate([h, c], axis=0)


def _reorder_ifgo_to_ifog(x, axis=0):
    """PyTorch LSTM gate blocks are (i, f, g, o); kernel uses (i, f, o, g)."""
    i, f, g, o = jnp.split(x, 4, axis=axis)
    return jnp.concatenate([i, f, o, g], axis=axis)


def encoder_params(w_ih, w_hh, b_ih, b_hh):
    """Convert PyTorch-layout LSTM weights to the kernel's fused layout."""
    w_ih_t = jnp.transpose(_reorder_ifgo_to_ifog(w_ih)).astype(jnp.float32)  # (E, 4H)
    w_hh_t = jnp.transpose(_reorder_ifgo_to_ifog(w_hh)).astype(jnp.float32)  # (H, 4H)
    bias = _reorder_ifgo_to_ifog((b_ih + b_hh)).reshape(1, -1).astype(jnp.float32)
    return w_ih_t, w_hh_t, bias


def encoder_forward_sequence(tokens, h0, c0, emb, w_ih_t, w_hh_t, bias):
    """Step the Encoder over a whole token sequence in one pallas_call.

    tokens: (T,) int; h0, c0: (1, 1, H) f32.
    Returns final (hidden, cell), each (1, 1, H) -- identical to applying the
    PyTorch module's forward once per token, feeding the state back in.
    """
    T = int(tokens.shape[0])
    V, E = emb.shape
    H = h0.shape[-1]

    h0f = h0.reshape(1, H).astype(jnp.float32)
    c0f = c0.reshape(1, H).astype(jnp.float32)
    if T == 0:  # empty sequence: state passes through unchanged
        return h0f.reshape(1, 1, H), c0f.reshape(1, 1, H)

    # Clamp token ids (no bounds checks on-device) and gather all embedding
    # rows up front: the table is tiny, so this is one cheap XLA gather.
    tokens = jnp.clip(tokens.astype(jnp.int32), 0, V - 1)
    x_all = jnp.take(emb.astype(jnp.float32), tokens, axis=0)        # (T, E)
    state0 = jnp.concatenate([h0f, c0f], axis=0)                     # (2, H)

    state = pl.pallas_call(
        _encoder_seq_kernel,
        out_shape=jax.ShapeDtypeStruct((2, H), jnp.float32),
        in_specs=[
            pl.BlockSpec(memory_space=pltpu.MemorySpace.VMEM),  # x_all
            pl.BlockSpec(memory_space=pltpu.MemorySpace.VMEM),  # W_ih^T
            pl.BlockSpec(memory_space=pltpu.MemorySpace.VMEM),  # W_hh^T
            pl.BlockSpec(memory_space=pltpu.MemorySpace.VMEM),  # bias
            pl.BlockSpec(memory_space=pltpu.MemorySpace.VMEM),  # state0
        ],
        out_specs=pl.BlockSpec(memory_space=pltpu.MemorySpace.VMEM),
        scratch_shapes=[pltpu.VMEM((T, 4 * H), jnp.float32)],   # pre_gates
    )(x_all, w_ih_t, w_hh_t, bias, state0)

    hidden = state[0:1].reshape(1, 1, H)
    cell = state[1:2].reshape(1, 1, H)
    return hidden, cell


def encoder_forward(token, h0, c0, emb, w_ih_t, w_hh_t, bias):
    """Single-step forward, exactly the PyTorch module's forward (T == 1)."""
    return encoder_forward_sequence(token.reshape(1), h0, c0, emb,
                                    w_ih_t, w_hh_t, bias)


def _reference_forward_sequence(tokens, h0, c0, emb, w_ih, w_hh, b_ih, b_hh):
    """Pure-JAX reference in the original PyTorch layout / gate order."""
    H = h0.shape[-1]
    h = h0.reshape(1, H).astype(jnp.float32)
    c = c0.reshape(1, H).astype(jnp.float32)
    for tok in list(tokens):
        x = emb[tok][None, :].astype(jnp.float32)
        gates = x @ w_ih.T + h @ w_hh.T + b_ih + b_hh
        i_g = jax.nn.sigmoid(gates[:, 0 * H:1 * H])
        f_g = jax.nn.sigmoid(gates[:, 1 * H:2 * H])
        g_g = jnp.tanh(gates[:, 2 * H:3 * H])
        o_g = jax.nn.sigmoid(gates[:, 3 * H:4 * H])
        c = f_g * c + i_g * g_g
        h = o_g * jnp.tanh(c)
    return h.reshape(1, 1, H), c.reshape(1, 1, H)


if __name__ == "__main__":
    # Small shapes implied by the module: vocab=16, embed_dim=32, hidden_dim=32,
    # n_layers=1, batch=1; stepped over a sequence of T=8 tokens.
    V, E, H, T = 16, 32, 32, 8

    key = jax.random.PRNGKey(0)
    k_emb, k_wih, k_whh, k_bih, k_bhh, k_tok, k_h, k_c = jax.random.split(key, 8)

    scale = 1.0 / jnp.sqrt(jnp.float32(H))
    emb = jax.random.uniform(k_emb, (V, E), jnp.float32, -1.0, 1.0)
    w_ih = jax.random.uniform(k_wih, (4 * H, E), jnp.float32, -scale, scale)  # PyTorch layout
    w_hh = jax.random.uniform(k_whh, (4 * H, H), jnp.float32, -scale, scale)  # PyTorch layout
    b_ih = jax.random.uniform(k_bih, (4 * H,), jnp.float32, -scale, scale)
    b_hh = jax.random.uniform(k_bhh, (4 * H,), jnp.float32, -scale, scale)

    tokens = jax.random.randint(k_tok, (T,), 0, V, dtype=jnp.int32)
    h0 = jax.random.normal(k_h, (1, 1, H), jnp.float32)
    c0 = jax.random.normal(k_c, (1, 1, H), jnp.float32)

    # Kernel-layout parameters (transposed, gate columns reordered i,f,o,g).
    w_ih_t, w_hh_t, bias = encoder_params(w_ih, w_hh, b_ih, b_hh)

    # Multi-step (in-kernel loop) path.
    hidden, cell = encoder_forward_sequence(tokens, h0, c0, emb, w_ih_t, w_hh_t, bias)
    hidden = jax.block_until_ready(hidden)
    cell = jax.block_until_ready(cell)

    h_ref, c_ref = _reference_forward_sequence(tokens, h0, c0, emb,
                                               w_ih, w_hh, b_ih, b_hh)
    assert hidden.shape == (1, 1, H) and cell.shape == (1, 1, H)
    assert jnp.allclose(hidden, h_ref, atol=2e-5, rtol=2e-4)
    assert jnp.allclose(cell, c_ref, atol=2e-5, rtol=2e-4)

    # Single-step path (exact module forward, T == 1).
    h1, c1 = encoder_forward(tokens[0:1], h0, c0, emb, w_ih_t, w_hh_t, bias)
    h1 = jax.block_until_ready(h1)
    c1 = jax.block_until_ready(c1)
    h1_ref, c1_ref = _reference_forward_sequence(tokens[0:1], h0, c0, emb,
                                                 w_ih, w_hh, b_ih, b_hh)
    assert jnp.allclose(h1, h1_ref, atol=2e-5, rtol=2e-4)
    assert jnp.allclose(c1, c1_ref, atol=2e-5, rtol=2e-4)

    print("KERNEL_OK")
</pallas_src>

<mosaic_0001>
module attributes {stable_mosaic.version = 11 : i64} {
  func.func @_encoder_seq_kernel(%arg0: memref<8x32xf32, #tpu.memory_space<vmem>>, %arg1: memref<32x128xf32, #tpu.memory_space<vmem>>, %arg2: memref<32x128xf32, #tpu.memory_space<vmem>>, %arg3: memref<1x128xf32, #tpu.memory_space<vmem>>, %arg4: memref<2x32xf32, #tpu.memory_space<vmem>>, %arg5: memref<2x32xf32, #tpu.memory_space<vmem>>, %arg6: memref<8x128xf32, #tpu.memory_space<vmem>>) attributes {dimension_semantics = [], scalar_prefetch = 0 : i64, scratch_operands = 1 : i64, tpu.core_type = #tpu.core_type<tc>} {
    %c0 = arith.constant 0 : index
    %c0_0 = arith.constant 0 : index
    %0 = vector.load %arg0[%c0, %c0_0] : memref<8x32xf32, #tpu.memory_space<vmem>>, vector<8x32xf32>
    %c0_1 = arith.constant 0 : index
    %c0_2 = arith.constant 0 : index
    %1 = vector.load %arg1[%c0_1, %c0_2] : memref<32x128xf32, #tpu.memory_space<vmem>>, vector<32x128xf32>
    %cst = arith.constant dense<0.000000e+00> : vector<8x128xf32>
    %2 = tpu.matmul %0, %1, %cst {dimension_numbers = #tpu.dot_dimension_numbers<[1], [0], [0], [1], [0, 0, 1, 1], [], []>} : vector<8x32xf32>, vector<32x128xf32>, vector<8x128xf32> -> vector<8x128xf32>
    %c0_3 = arith.constant 0 : index
    %c0_4 = arith.constant 0 : index
    %3 = vector.load %arg3[%c0_3, %c0_4] : memref<1x128xf32, #tpu.memory_space<vmem>>, vector<1x128xf32>
    %4 = vector.broadcast %3 : vector<1x128xf32> to vector<8x128xf32>
    %5 = arith.addf %2, %4 : vector<8x128xf32>
    %c0_5 = arith.constant 0 : index
    %c0_6 = arith.constant 0 : index
    %6 = vector.load %arg6[%c0_5, %c0_6] : memref<8x128xf32, #tpu.memory_space<vmem>>, vector<8x128xf32>
    tpu.vector_store %arg6[%c0_5, %c0_6], %5 {strides = array<i32>} : memref<8x128xf32, #tpu.memory_space<vmem>>, vector<8x128xf32>,
    %c0_7 = arith.constant 0 : index
    %c0_8 = arith.constant 0 : index
    %7 = vector.load %arg2[%c0_7, %c0_8] : memref<32x128xf32, #tpu.memory_space<vmem>>, vector<32x128xf32>
    %c0_9 = arith.constant 0 : index
    %c0_10 = arith.constant 0 : index
    %8 = vector.load %arg4[%c0_9, %c0_10] : memref<2x32xf32, #tpu.memory_space<vmem>>, vector<1x32xf32>
    %c1 = arith.constant 1 : index
    %c0_11 = arith.constant 0 : index
    %9 = vector.load %arg4[%c1, %c0_11] : memref<2x32xf32, #tpu.memory_space<vmem>>, vector<1x32xf32>
    %c0_i32 = arith.constant 0 : i32
    %10 = arith.index_cast %c0_i32 : i32 to index
    %c0_12 = arith.constant 0 : index
    %11 = vector.load %arg6[%10, %c0_12] : memref<8x128xf32, #tpu.memory_space<vmem>>, vector<1x128xf32>
    %cst_13 = arith.constant dense<0.000000e+00> : vector<1x128xf32>
    %12 = tpu.matmul %8, %7, %cst_13 {dimension_numbers = #tpu.dot_dimension_numbers<[1], [0], [0], [1], [0, 0, 1, 1], [], []>} : vector<1x32xf32>, vector<32x128xf32>, vector<1x128xf32> -> vector<1x128xf32>
    %13 = arith.addf %11, %12 : vector<1x128xf32>
    %14 = arith.negf %13 : vector<1x128xf32>
    %15 = math.exp %14 : vector<1x128xf32>
    %cst_14 = arith.constant 1.000000e+00 : f32
    %16 = vector.broadcast %cst_14 : f32 to vector<1x128xf32>
    %17 = arith.addf %16, %15 : vector<1x128xf32>
    %18 = arith.divf %16, %17 : vector<1x128xf32>
    %19 = vector.extract_strided_slice %18 {offsets = [0, 0], sizes = [1, 32], strides = [1, 1]} : vector<1x128xf32> to vector<1x32xf32>
    %20 = vector.extract_strided_slice %18 {offsets = [0, 32], sizes = [1, 32], strides = [1, 1]} : vector<1x128xf32> to vector<1x32xf32>
    %21 = vector.extract_strided_slice %18 {offsets = [0, 64], sizes = [1, 32], strides = [1, 1]} : vector<1x128xf32> to vector<1x32xf32>
    %22 = vector.extract_strided_slice %13 {offsets = [0, 96], sizes = [1, 32], strides = [1, 1]} : vector<1x128xf32> to vector<1x32xf32>
    %23 = math.tanh %22 : vector<1x32xf32>
    %24 = arith.mulf %20, %9 : vector<1x32xf32>
    %25 = arith.mulf %19, %23 : vector<1x32xf32>
    %26 = arith.addf %24, %25 : vector<1x32xf32>
    %27 = math.tanh %26 : vector<1x32xf32>
    %28 = arith.mulf %21, %27 : vector<1x32xf32>
    %c1_i32 = arith.constant 1 : i32
    %29 = arith.index_cast %c1_i32 : i32 to index
    %c0_15 = arith.constant 0 : index
    %30 = vector.load %arg6[%29, %c0_15] : memref<8x128xf32, #tpu.memory_space<vmem>>, vector<1x128xf32>
    %cst_16 = arith.constant dense<0.000000e+00> : vector<1x128xf32>
    %31 = tpu.matmul %28, %7, %cst_16 {dimension_numbers = #tpu.dot_dimension_numbers<[1], [0], [0], [1], [0, 0, 1, 1], [], []>} : vector<1x32xf32>, vector<32x128xf32>, vector<1x128xf32> -> vector<1x128xf32>
    %32 = arith.addf %30, %31 : vector<1x128xf32>
    %33 = arith.negf %32 : vector<1x128xf32>
    %34 = math.exp %33 : vector<1x128xf32>
    %cst_17 = arith.constant 1.000000e+00 : f32
    %35 = vector.broadcast %cst_17 : f32 to vector<1x128xf32>
    %36 = arith.addf %35, %34 : vector<1x128xf32>
    %37 = arith.divf %35, %36 : vector<1x128xf32>
    %38 = vector.extract_strided_slice %37 {offsets = [0, 0], sizes = [1, 32], strides = [1, 1]} : vector<1x128xf32> to vector<1x32xf32>
    %39 = vector.extract_strided_slice %37 {offsets = [0, 32], sizes = [1, 32], strides = [1, 1]} : vector<1x128xf32> to vector<1x32xf32>
    %40 = vector.extract_strided_slice %37 {offsets = [0, 64], sizes = [1, 32], strides = [1, 1]} : vector<1x128xf32> to vector<1x32xf32>
    %41 = vector.extract_strided_slice %32 {offsets = [0, 96], sizes = [1, 32], strides = [1, 1]} : vector<1x128xf32> to vector<1x32xf32>
    %42 = math.tanh %41 : vector<1x32xf32>
    %43 = arith.mulf %39, %26 : vector<1x32xf32>
    %44 = arith.mulf %38, %42 : vector<1x32xf32>
    %45 = arith.addf %43, %44 : vector<1x32xf32>
    %46 = math.tanh %45 : vector<1x32xf32>
    %47 = arith.mulf %40, %46 : vector<1x32xf32>
    %c2_i32 = arith.constant 2 : i32
    %48 = arith.index_cast %c2_i32 : i32 to index
    %c0_18 = arith.constant 0 : index
    %49 = vector.load %arg6[%48, %c0_18] : memref<8x128xf32, #tpu.memory_space<vmem>>, vector<1x128xf32>
    %cst_19 = arith.constant dense<0.000000e+00> : vector<1x128xf32>
    %50 = tpu.matmul %47, %7, %cst_19 {dimension_numbers = #tpu.dot_dimension_numbers<[1], [0], [0], [1], [0, 0, 1, 1], [], []>} : vector<1x32xf32>, vector<32x128xf32>, vector<1x128xf32> -> vector<1x128xf32>
    %51 = arith.addf %49, %50 : vector<1x128xf32>
    %52 = arith.negf %51 : vector<1x128xf32>
    %53 = math.exp %52 : vector<1x128xf32>
    %cst_20 = arith.constant 1.000000e+00 : f32
    %54 = vector.broadcast %cst_20 : f32 to vector<1x128xf32>
    %55 = arith.addf %54, %53 : vector<1x128xf32>
    %56 = arith.divf %54, %55 : vector<1x128xf32>
    %57 = vector.extract_strided_slice %56 {offsets = [0, 0], sizes = [1, 32], strides = [1, 1]} : vector<1x128xf32> to vector<1x32xf32>
    %58 = vector.extract_strided_slice %56 {offsets = [0, 32], sizes = [1, 32], strides = [1, 1]} : vector<1x128xf32> to vector<1x32xf32>
    %59 = vector.extract_strided_slice %56 {offsets = [0, 64], sizes = [1, 32], strides = [1, 1]} : vector<1x128xf32> to vector<1x32xf32>
    %60 = vector.extract_strided_slice %51 {offsets = [0, 96], sizes = [1, 32], strides = [1, 1]} : vector<1x128xf32> to vector<1x32xf32>
    %61 = math.tanh %60 : vector<1x32xf32>
    %62 = arith.mulf %58, %45 : vector<1x32xf32>
    %63 = arith.mulf %57, %61 : vector<1x32xf32>
    %64 = arith.addf %62, %63 : vector<1x32xf32>
    %65 = math.tanh %64 : vector<1x32xf32>
    %66 = arith.mulf %59, %65 : vector<1x32xf32>
    %c3_i32 = arith.constant 3 : i32
    %67 = arith.index_cast %c3_i32 : i32 to index
    %c0_21 = arith.constant 0 : index
    %68 = vector.load %arg6[%67, %c0_21] : memref<8x128xf32, #tpu.memory_space<vmem>>, vector<1x128xf32>
    %cst_22 = arith.constant dense<0.000000e+00> : vector<1x128xf32>
    %69 = tpu.matmul %66, %7, %cst_22 {dimension_numbers = #tpu.dot_dimension_numbers<[1], [0], [0], [1], [0, 0, 1, 1], [], []>} : vector<1x32xf32>, vector<32x128xf32>, vector<1x128xf32> -> vector<1x128xf32>
    %70 = arith.addf %68, %69 : vector<1x128xf32>
    %71 = arith.negf %70 : vector<1x128xf32>
    %72 = math.exp %71 : vector<1x128xf32>
    %cst_23 = arith.constant 1.000000e+00 : f32
    %73 = vector.broadcast %cst_23 : f32 to vector<1x128xf32>
    %74 = arith.addf %73, %72 : vector<1x128xf32>
    %75 = arith.divf %73, %74 : vector<1x128xf32>
    %76 = vector.extract_strided_slice %75 {offsets = [0, 0], sizes = [1, 32], strides = [1, 1]} : vector<1x128xf32> to vector<1x32xf32>
    %77 = vector.extract_strided_slice %75 {offsets = [0, 32], sizes = [1, 32], strides = [1, 1]} : vector<1x128xf32> to vector<1x32xf32>
    %78 = vector.extract_strided_slice %75 {offsets = [0, 64], sizes = [1, 32], strides = [1, 1]} : vector<1x128xf32> to vector<1x32xf32>
    %79 = vector.extract_strided_slice %70 {offsets = [0, 96], sizes = [1, 32], strides = [1, 1]} : vector<1x128xf32> to vector<1x32xf32>
    %80 = math.tanh %79 : vector<1x32xf32>
    %81 = arith.mulf %77, %64 : vector<1x32xf32>
    %82 = arith.mulf %76, %80 : vector<1x32xf32>
    %83 = arith.addf %81, %82 : vector<1x32xf32>
    %84 = math.tanh %83 : vector<1x32xf32>
    %85 = arith.mulf %78, %84 : vector<1x32xf32>
    %c4_i32 = arith.constant 4 : i32
    %86 = arith.index_cast %c4_i32 : i32 to index
    %c0_24 = arith.constant 0 : index
    %87 = vector.load %arg6[%86, %c0_24] : memref<8x128xf32, #tpu.memory_space<vmem>>, vector<1x128xf32>
    %cst_25 = arith.constant dense<0.000000e+00> : vector<1x128xf32>
    %88 = tpu.matmul %85, %7, %cst_25 {dimension_numbers = #tpu.dot_dimension_numbers<[1], [0], [0], [1], [0, 0, 1, 1], [], []>} : vector<1x32xf32>, vector<32x128xf32>, vector<1x128xf32> -> vector<1x128xf32>
    %89 = arith.addf %87, %88 : vector<1x128xf32>
    %90 = arith.negf %89 : vector<1x128xf32>
    %91 = math.exp %90 : vector<1x128xf32>
    %cst_26 = arith.constant 1.000000e+00 : f32
    %92 = vector.broadcast %cst_26 : f32 to vector<1x128xf32>
    %93 = arith.addf %92, %91 : vector<1x128xf32>
    %94 = arith.divf %92, %93 : vector<1x128xf32>
    %95 = vector.extract_strided_slice %94 {offsets = [0, 0], sizes = [1, 32], strides = [1, 1]} : vector<1x128xf32> to vector<1x32xf32>
    %96 = vector.extract_strided_slice %94 {offsets = [0, 32], sizes = [1, 32], strides = [1, 1]} : vector<1x128xf32> to vector<1x32xf32>
    %97 = vector.extract_strided_slice %94 {offsets = [0, 64], sizes = [1, 32], strides = [1, 1]} : vector<1x128xf32> to vector<1x32xf32>
    %98 = vector.extract_strided_slice %89 {offsets = [0, 96], sizes = [1, 32], strides = [1, 1]} : vector<1x128xf32> to vector<1x32xf32>
    %99 = math.tanh %98 : vector<1x32xf32>
    %100 = arith.mulf %96, %83 : vector<1x32xf32>
    %101 = arith.mulf %95, %99 : vector<1x32xf32>
    %102 = arith.addf %100, %101 : vector<1x32xf32>
    %103 = math.tanh %102 : vector<1x32xf32>
    %104 = arith.mulf %97, %103 : vector<1x32xf32>
    %c5_i32 = arith.constant 5 : i32
    %105 = arith.index_cast %c5_i32 : i32 to index
    %c0_27 = arith.constant 0 : index
    %106 = vector.load %arg6[%105, %c0_27] : memref<8x128xf32, #tpu.memory_space<vmem>>, vector<1x128xf32>
    %cst_28 = arith.constant dense<0.000000e+00> : vector<1x128xf32>
    %107 = tpu.matmul %104, %7, %cst_28 {dimension_numbers = #tpu.dot_dimension_numbers<[1], [0], [0], [1], [0, 0, 1, 1], [], []>} : vector<1x32xf32>, vector<32x128xf32>, vector<1x128xf32> -> vector<1x128xf32>
    %108 = arith.addf %106, %107 : vector<1x128xf32>
    %109 = arith.negf %108 : vector<1x128xf32>
    %110 = math.exp %109 : vector<1x128xf32>
    %cst_29 = arith.constant 1.000000e+00 : f32
    %111 = vector.broadcast %cst_29 : f32 to vector<1x128xf32>
    %112 = arith.addf %111, %110 : vector<1x128xf32>
    %113 = arith.divf %111, %112 : vector<1x128xf32>
    %114 = vector.extract_strided_slice %113 {offsets = [0, 0], sizes = [1, 32], strides = [1, 1]} : vector<1x128xf32> to vector<1x32xf32>
    %115 = vector.extract_strided_slice %113 {offsets = [0, 32], sizes = [1, 32], strides = [1, 1]} : vector<1x128xf32> to vector<1x32xf32>
    %116 = vector.extract_strided_slice %113 {offsets = [0, 64], sizes = [1, 32], strides = [1, 1]} : vector<1x128xf32> to vector<1x32xf32>
    %117 = vector.extract_strided_slice %108 {offsets = [0, 96], sizes = [1, 32], strides = [1, 1]} : vector<1x128xf32> to vector<1x32xf32>
    %118 = math.tanh %117 : vector<1x32xf32>
    %119 = arith.mulf %115, %102 : vector<1x32xf32>
    %120 = arith.mulf %114, %118 : vector<1x32xf32>
    %121 = arith.addf %119, %120 : vector<1x32xf32>
    %122 = math.tanh %121 : vector<1x32xf32>
    %123 = arith.mulf %116, %122 : vector<1x32xf32>
    %c6_i32 = arith.constant 6 : i32
    %124 = arith.index_cast %c6_i32 : i32 to index
    %c0_30 = arith.constant 0 : index
    %125 = vector.load %arg6[%124, %c0_30] : memref<8x128xf32, #tpu.memory_space<vmem>>, vector<1x128xf32>
    %cst_31 = arith.constant dense<0.000000e+00> : vector<1x128xf32>
    %126 = tpu.matmul %123, %7, %cst_31 {dimension_numbers = #tpu.dot_dimension_numbers<[1], [0], [0], [1], [0, 0, 1, 1], [], []>} : vector<1x32xf32>, vector<32x128xf32>, vector<1x128xf32> -> vector<1x128xf32>
    %127 = arith.addf %125, %126 : vector<1x128xf32>
    %128 = arith.negf %127 : vector<1x128xf32>
    %129 = math.exp %128 : vector<1x128xf32>
    %cst_32 = arith.constant 1.000000e+00 : f32
    %130 = vector.broadcast %cst_32 : f32 to vector<1x128xf32>
    %131 = arith.addf %130, %129 : vector<1x128xf32>
    %132 = arith.divf %130, %131 : vector<1x128xf32>
    %133 = vector.extract_strided_slice %132 {offsets = [0, 0], sizes = [1, 32], strides = [1, 1]} : vector<1x128xf32> to vector<1x32xf32>
    %134 = vector.extract_strided_slice %132 {offsets = [0, 32], sizes = [1, 32], strides = [1, 1]} : vector<1x128xf32> to vector<1x32xf32>
    %135 = vector.extract_strided_slice %132 {offsets = [0, 64], sizes = [1, 32], strides = [1, 1]} : vector<1x128xf32> to vector<1x32xf32>
    %136 = vector.extract_strided_slice %127 {offsets = [0, 96], sizes = [1, 32], strides = [1, 1]} : vector<1x128xf32> to vector<1x32xf32>
    %137 = math.tanh %136 : vector<1x32xf32>
    %138 = arith.mulf %134, %121 : vector<1x32xf32>
    %139 = arith.mulf %133, %137 : vector<1x32xf32>
    %140 = arith.addf %138, %139 : vector<1x32xf32>
    %141 = math.tanh %140 : vector<1x32xf32>
    %142 = arith.mulf %135, %141 : vector<1x32xf32>
    %c7_i32 = arith.constant 7 : i32
    %143 = arith.index_cast %c7_i32 : i32 to index
    %c0_33 = arith.constant 0 : index
    %144 = vector.load %arg6[%143, %c0_33] : memref<8x128xf32, #tpu.memory_space<vmem>>, vector<1x128xf32>
    %cst_34 = arith.constant dense<0.000000e+00> : vector<1x128xf32>
    %145 = tpu.matmul %142, %7, %cst_34 {dimension_numbers = #tpu.dot_dimension_numbers<[1], [0], [0], [1], [0, 0, 1, 1], [], []>} : vector<1x32xf32>, vector<32x128xf32>, vector<1x128xf32> -> vector<1x128xf32>
    %146 = arith.addf %144, %145 : vector<1x128xf32>
    %147 = arith.negf %146 : vector<1x128xf32>
    %148 = math.exp %147 : vector<1x128xf32>
    %cst_35 = arith.constant 1.000000e+00 : f32
    %149 = vector.broadcast %cst_35 : f32 to vector<1x128xf32>
    %150 = arith.addf %149, %148 : vector<1x128xf32>
    %151 = arith.divf %149, %150 : vector<1x128xf32>
    %152 = vector.extract_strided_slice %151 {offsets = [0, 0], sizes = [1, 32], strides = [1, 1]} : vector<1x128xf32> to vector<1x32xf32>
    %153 = vector.extract_strided_slice %151 {offsets = [0, 32], sizes = [1, 32], strides = [1, 1]} : vector<1x128xf32> to vector<1x32xf32>
    %154 = vector.extract_strided_slice %151 {offsets = [0, 64], sizes = [1, 32], strides = [1, 1]} : vector<1x128xf32> to vector<1x32xf32>
    %155 = vector.extract_strided_slice %146 {offsets = [0, 96], sizes = [1, 32], strides = [1, 1]} : vector<1x128xf32> to vector<1x32xf32>
    %156 = math.tanh %155 : vector<1x32xf32>
    %157 = arith.mulf %153, %140 : vector<1x32xf32>
    %158 = arith.mulf %152, %156 : vector<1x32xf32>
    %159 = arith.addf %157, %158 : vector<1x32xf32>
    %160 = math.tanh %159 : vector<1x32xf32>
    %161 = arith.mulf %154, %160 : vector<1x32xf32>
    %c8_i32 = arith.constant 8 : i32
    %162 = tpu.concatenate %161, %159 in 0 : vector<1x32xf32>, vector<1x32xf32> -> vector<2x32xf32>
    %c0_36 = arith.constant 0 : index
    %c0_37 = arith.constant 0 : index
    %163 = vector.load %arg5[%c0_36, %c0_37] : memref<2x32xf32, #tpu.memory_space<vmem>>, vector<2x32xf32>
    tpu.vector_store %arg5[%c0_36, %c0_37], %162 {strides = array<i32>} : memref<2x32xf32, #tpu.memory_space<vmem>>, vector<2x32xf32>,
    return
  }
}

</mosaic_0001>

<llo_original>
// kernel: tpu_custom_call.1
$region0: #{tpu_custom_call.1}
  #allocation0 [shape = 'u32[]', space=smem, size = 0x4, offset = 0x4, fixed_abs, tag = 'smem constant byte address 0x4 - core index']
  #allocation1 [shape = 'u32[144,128]{1,0:T(1,128)}', space=vmem, size = 0x12000, scoped, tag = 'internal scratch']
  #allocation2 [shape = 'f32[8,128]{1,0:T(8,128)}', space=vmem, size = 0x1000, scoped, tag = 'scratch operand']
  %s0 = inlined_call_operand.hbm [shape: f32[8,32], index: 0, kind: input, shape index: {}]
  %s1 = inlined_call_operand.hbm [shape: f32[32,128], index: 1, kind: input, shape index: {}]
  %s2 = inlined_call_operand.hbm [shape: f32[32,128], index: 2, kind: input, shape index: {}]
  %s3 = inlined_call_operand.vmem [shape: f32[1,128], index: 3, kind: input, shape index: {}]
  %s4 = inlined_call_operand.vmem [shape: f32[2,32], index: 4, kind: input, shape index: {}]
  %s5 = inlined_call_operand.hbm [shape: f32[2,32], index: 5, kind: output, shape index: {}]
  %s6 = sld [smem:[#allocation0]]
  $region42: #{tpu_custom_call.1} parent=0
    _
  %s8 = ssub.s32 1, %s6
  %s9 = scalar_select 0, %s8, %s6
  $region1: #{tpu_custom_call.1} parent=0
    #allocation3 [shape = 'u8[4096]{0}', space=vmem, size = 0x1000, scoped, tag = 'input window, operand 0, single buffered']
    #allocation4 [shape = 's32[1]{0}', space=sflag, size = 0x4, scoped, tag = 'scoped memory for tpu_custom_call.1']
    #allocation5 [shape = 's32[1]{0}', space=sflag, size = 0x4, scoped, tag = 'scoped memory for tpu_custom_call.1']
    #allocation6 [shape = 'u8[16384]{0}', space=vmem, size = 0x4000, scoped, tag = 'input window, operand 1, single buffered']
    #allocation7 [shape = 's32[1]{0}', space=sflag, size = 0x4, scoped, tag = 'scoped memory for tpu_custom_call.1']
    #allocation8 [shape = 'u8[16384]{0}', space=vmem, size = 0x4000, scoped, tag = 'input window, operand 2, single buffered']
    #allocation9 [shape = 'u8[1024]{0}', space=vmem, size = 0x400, scoped, tag = 'output window, operand 0, single buffered']
    %10 = vsyncpa [#allocation4], 0
    %11 = vsyncpa [#allocation7], 0
    %12 = vsyncpa [#allocation5], 0
    // Predicated region
    $region2: #{tpu_custom_call.1} parent=1 // pred_check
      _
    $region3: #{tpu_custom_call.1} parent=1 // pred_check_branch
      %14 = sbr.rel (0) target = $region5
    $region4: #{tpu_custom_call.1} parent=1 // pred_region
      %s16 = ssub.s32 128, 128
      %17 = vsyncadd [#allocation4], %s16
      %s19 = sshll.u32 [#allocation3], 4
      %s20 = int_to_ptr.vmem [resolvable:$true] %s19
      %22 = dma.hbm_to_vmem [thread:$0]  %s0, 128, %s20, [#allocation4]
    $region5: #{tpu_custom_call.1} parent=1 // pred_fallthru
      _
    // Predicated region
    $region6: #{tpu_custom_call.1} parent=1 // pred_check
      _
    $region7: #{tpu_custom_call.1} parent=1 // pred_check_branch
      %24 = sbr.rel (0) target = $region9
    $region8: #{tpu_custom_call.1} parent=1 // pred_region
      %s26 = ssub.s32 512, 512
      %27 = vsyncadd [#allocation7], %s26
      %s28 = sshll.u32 [#allocation6], 4
      %s29 = int_to_ptr.vmem [resolvable:$true] %s28
      %34 = dma.hbm_to_vmem [thread:$0]  %s1, 512, %s29, [#allocation7], 128, 128, 8
    $region9: #{tpu_custom_call.1} parent=1 // pred_fallthru
      _
    // Predicated region
    $region10: #{tpu_custom_call.1} parent=1 // pred_check
      _
    $region11: #{tpu_custom_call.1} parent=1 // pred_check_branch
      %36 = sbr.rel (0) target = $region13
    $region12: #{tpu_custom_call.1} parent=1 // pred_region
      %s38 = ssub.s32 512, 512
      %39 = vsyncadd [#allocation7], %s38
      %s40 = sshll.u32 [#allocation8], 4
      %s41 = int_to_ptr.vmem [resolvable:$true] %s40
      %46 = dma.hbm_to_vmem [thread:$0]  %s2, 512, %s41, [#allocation7], 128, 128, 8
    $region13: #{tpu_custom_call.1} parent=1 // pred_fallthru
      _
    // Predicated region
    $region14: #{tpu_custom_call.1} parent=1 // pred_check
      _
    $region15: #{tpu_custom_call.1} parent=1 // pred_check_branch
      %48 = sbr.rel (0) target = $region17
    $region16: #{tpu_custom_call.1} parent=1 // pred_region
      _
    $region17: #{tpu_custom_call.1} parent=1 // pred_fallthru
      _
    // Predicated region
    $region18: #{tpu_custom_call.1} parent=1 // pred_check
      _
    $region19: #{tpu_custom_call.1} parent=1 // pred_check_branch
      %50 = sbr.rel (0) target = $region21
    $region20: #{tpu_custom_call.1} parent=1 // pred_region
      _
    $region21: #{tpu_custom_call.1} parent=1 // pred_fallthru
      _
    // Predicated region
    $region22: #{tpu_custom_call.1} parent=1 // pred_check
      _
    $region23: #{tpu_custom_call.1} parent=1 // pred_check_branch
      %52 = sbr.rel (0) target = $region25
    $region24: #{tpu_custom_call.1} parent=1 // pred_region
      %53 = dma.done [#allocation4], 128
    $region25: #{tpu_custom_call.1} parent=1 // pred_fallthru
      _
    // Predicated region
    $region26: #{tpu_custom_call.1} parent=1 // pred_check
      _
    $region27: #{tpu_custom_call.1} parent=1 // pred_check_branch
      %55 = sbr.rel (0) target = $region29
    $region28: #{tpu_custom_call.1} parent=1 // pred_region
      %56 = dma.done [#allocation7], 512
    $region29: #{tpu_custom_call.1} parent=1 // pred_fallthru
      _
    // Predicated region
    $region30: #{tpu_custom_call.1} parent=1 // pred_check
      _
    $region31: #{tpu_custom_call.1} parent=1 // pred_check_branch
      %58 = sbr.rel (0) target = $region33
    $region32: #{tpu_custom_call.1} parent=1 // pred_region
      %59 = dma.done [#allocation7], 512
    $region33: #{tpu_custom_call.1} parent=1 // pred_fallthru
      _
    %v60 = vld [vmem:[#allocation3] sm:$0xff]
    %v61 = vld [vmem:[#allocation6] sm:$0xff]
    %v62 = vld [vmem:[#allocation6 + $0x8] sm:$0xff]
    %v63 = vld [vmem:[#allocation6 + $0x10] sm:$0xff]
    %v64 = vld [vmem:[#allocation6 + $0x18] sm:$0xff]
    %v65 = vld [vmem:[%s3] sm:$0x1]
    %v67 = vlaneseq
    %v68 = vshrl.u32 %v67, 7
    %v69 = vsub.s32 0, %v68
    %v70 = vrot.slane %v65, %v69
    %vm72 = vcmask 261120
    %v74 = vsel %vm72, %v60, 0
    %76 = vmatprep.subr.mxu0 0.0
    %77 = vmatpush1.msra.mxu0 %v61
    %78 = vmatprep.subr.mxu0 0.0
    %79 = vmatpush1.msra.mxu0 %v62
    %80 = vmatprep.subr.mxu0 0.0
    %81 = vmatpush1.msra.mxu0 %v63
    %82 = vmatprep.subr.mxu0 0.0
    %83 = vmatpush1.msra.mxu0 %v64
    %84 = vmatprep.subr.mxu0 0.0
    %85 = vmatpush1.msra.mxu0 0.0
    %86 = vmatprep.subr.mxu0 0.0
    %87 = vmatpush1.msra.mxu0 0.0
    %88 = vmatprep.subr.mxu0 0.0
    %89 = vmatpush1.msra.mxu0 0.0
    %90 = vmatprep.subr.mxu0 0.0
    %91 = vmatpush1.msra.mxu0 0.0
    %92 = vmatprep.subr.mxu0 0.0
    %93 = vmatpush1.msra.mxu0 0.0
    %94 = vmatprep.subr.mxu0 0.0
    %95 = vmatpush1.msra.mxu0 0.0
    %96 = vmatprep.subr.mxu0 0.0
    %97 = vmatpush1.msra.mxu0 0.0
    %98 = vmatprep.subr.mxu0 0.0
    %99 = vmatpush1.msra.mxu0 0.0
    %100 = vmatprep.subr.mxu0 0.0
    %101 = vmatpush1.msra.mxu0 0.0
    %102 = vmatprep.subr.mxu0 0.0
    %103 = vmatpush1.msra.mxu0 0.0
    %104 = vmatprep.subr.mxu0 0.0
    %105 = vmatpush1.msra.mxu0 0.0
    %106 = vmatprep.subr.mxu0 0.0
    %107 = vmatpush1.msra.mxu0 0.0
    %108 = vmatprep.subr.mxu0 0.0
    %109 = vmatpush1.msra.mxu0 0.0
    %110 = vmatprep.subr.mxu0 0.0
    %111 = vmatpush1.msra.mxu0 0.0
    %112 = vmatprep.subr.mxu0 0.0
    %113 = vmatpush1.msra.mxu0 0.0
    %114 = vmatprep.subr.mxu0 0.0
    %115 = vmatpush1.msra.mxu0 0.0
    %116 = vmatprep.subr.mxu0 0.0
    %117 = vmatpush1.msra.mxu0 0.0
    %118 = vmatprep.subr.mxu0 0.0
    %119 = vmatpush1.msra.mxu0 0.0
    %120 = vmatprep.subr.mxu0 0.0
    %121 = vmatpush1.msra.mxu0 0.0
    %122 = vmatprep.subr.mxu0 0.0
    %123 = vmatpush1.msra.mxu0 0.0
    %124 = vmatprep.subr.mxu0 0.0
    %125 = vmatpush1.msra.mxu0 0.0
    %126 = vmatprep.subr.mxu0 0.0
    %127 = vmatpush1.msra.mxu0 0.0
    %128 = vmatprep.subr.mxu0 0.0
    %129 = vmatpush1.msra.mxu0 0.0
    %130 = vmatprep.subr.mxu0 0.0
    %131 = vmatpush1.msra.mxu0 0.0
    %132 = vmatprep.subr.mxu0 0.0
    %133 = vmatpush1.msra.mxu0 0.0
    %134 = vmatprep.subr.mxu0 0.0
    %135 = vmatpush1.msra.mxu0 0.0
    %136 = vmatprep.subr.mxu0 0.0
    %137 = vmatpush1.msra.mxu0 0.0
    %138 = vmatprep.subr.mxu0 0.0
    %139 = vmatpush1.msra.mxu0 0.0
    %140 = vmatprep.mubr.f32.mxu0 0.0
    %141 = vmatmul.mubr.f32.gmra.mrb[0].mxu0 %v74
    %v142 = vpop.f32.mrb[0].mxu0
    %v143 = vadd.f32 %v70, %v142
    %v144 = vpop.f32.mrb[0].mxu0
    %145 = vdwg.mxu0
    %146 = vst [vmem:[#allocation2] sm:$0xff] %v143
    %v147 = vld [vmem:[#allocation8] sm:$0xff]
    %v148 = vld [vmem:[#allocation8 + $0x8] sm:$0xff]
    %v149 = vld [vmem:[#allocation8 + $0x10] sm:$0xff]
    %v150 = vld [vmem:[#allocation8 + $0x18] sm:$0xff]
    %v151 = vld [vmem:[%s4] sm:$0x1]
    %v152 = vld [vmem:[%s4 + $0x1] sm:$0x1]
    %v153 = vld [vmem:[#allocation2] sm:$0x1]
    %v155 = vsel %vm72, %v151, 0
    %157 = vmatprep.subr.mxu0 0.0
    %158 = vmatpush1.msra.mxu0 %v147
    %159 = vmatprep.subr.mxu0 0.0
    %160 = vmatpush1.msra.mxu0 %v148
    %161 = vmatprep.subr.mxu0 0.0
    %162 = vmatpush1.msra.mxu0 %v149
    %163 = vmatprep.subr.mxu0 0.0
    %164 = vmatpush1.msra.mxu0 %v150
    %165 = vmatprep.subr.mxu0 0.0
    %166 = vmatpush1.msra.mxu0 0.0
    %167 = vmatprep.subr.mxu0 0.0
    %168 = vmatpush1.msra.mxu0 0.0
    %169 = vmatprep.subr.mxu0 0.0
    %170 = vmatpush1.msra.mxu0 0.0
    %171 = vmatprep.subr.mxu0 0.0
    %172 = vmatpush1.msra.mxu0 0.0
    %173 = vmatprep.subr.mxu0 0.0
    %174 = vmatpush1.msra.mxu0 0.0
    %175 = vmatprep.subr.mxu0 0.0
    %176 = vmatpush1.msra.mxu0 0.0
    %177 = vmatprep.subr.mxu0 0.0
    %178 = vmatpush1.msra.mxu0 0.0
    %179 = vmatprep.subr.mxu0 0.0
    %180 = vmatpush1.msra.mxu0 0.0
    %181 = vmatprep.subr.mxu0 0.0
    %182 = vmatpush1.msra.mxu0 0.0
    %183 = vmatprep.subr.mxu0 0.0
    %184 = vmatpush1.msra.mxu0 0.0
    %185 = vmatprep.subr.mxu0 0.0
    %186 = vmatpush1.msra.mxu0 0.0
    %187 = vmatprep.subr.mxu0 0.0
    %188 = vmatpush1.msra.mxu0 0.0
    %189 = vmatprep.subr.mxu0 0.0
    %190 = vmatpush1.msra.mxu0 0.0
    %191 = vmatprep.subr.mxu0 0.0
    %192 = vmatpush1.msra.mxu0 0.0
    %193 = vmatprep.subr.mxu0 0.0
    %194 = vmatpush1.msra.mxu0 0.0
    %195 = vmatprep.subr.mxu0 0.0
    %196 = vmatpush1.msra.mxu0 0.0
    %197 = vmatprep.subr.mxu0 0.0
    %198 = vmatpush1.msra.mxu0 0.0
    %199 = vmatprep.subr.mxu0 0.0
    %200 = vmatpush1.msra.mxu0 0.0
    %201 = vmatprep.subr.mxu0 0.0
    %202 = vmatpush1.msra.mxu0 0.0
    %203 = vmatprep.subr.mxu0 0.0
    %204 = vmatpush1.msra.mxu0 0.0
    %205 = vmatprep.subr.mxu0 0.0
    %206 = vmatpush1.msra.mxu0 0.0
    %207 = vmatprep.subr.mxu0 0.0
    %208 = vmatpush1.msra.mxu0 0.0
    %209 = vmatprep.subr.mxu0 0.0
    %210 = vmatpush1.msra.mxu0 0.0
    %211 = vmatprep.subr.mxu0 0.0
    %212 = vmatpush1.msra.mxu0 0.0
    %213 = vmatprep.subr.mxu0 0.0
    %214 = vmatpush1.msra.mxu0 0.0
    %215 = vmatprep.subr.mxu0 0.0
    %216 = vmatpush1.msra.mxu0 0.0
    %217 = vmatprep.subr.mxu0 0.0
    %218 = vmatpush1.msra.mxu0 0.0
    %219 = vmatprep.subr.mxu0 0.0
    %220 = vmatpush1.msra.mxu0 0.0
    %221 = vmatprep.mubr.f32.mxu0 0.0
    %222 = vmatmul.mubr.f32.gmra.mrb[0].mxu0 %v155
    %v223 = vpop.f32.mrb[0].mxu0
    %v224 = vadd.f32 0.0, %v223
    %v225 = vpop.f32.mrb[0].mxu0
    %226 = vdwg.mxu0
    %v227 = vadd.f32 %v153, %v224
    %v228 = vxor.u32 %v227, 2147483648
    %v229 = vmul.f32 %v228, 1.442695
    %v230 = vpow.pop %v229
    %v231 = vadd.f32 %v230, 1.0
    %v232 = vrcp.pop %v231
    %v233 = vmul.f32 1.0, %v232
    %v234 = vtanh.pop %v227
    %236 = vrot.lane.b32.xlu0 %v152, 32
    %v237 = vpop.permute.xlu0 %236
    %v239 = vmul.f32 %v233, %v237
    %241 = vrot.lane.b32.xlu0 %v234, 32
    %v242 = vpop.permute.xlu0 %241
    %v244 = vmul.f32 %v233, %v242
    %246 = vrot.lane.b32.xlu0 %v244, 32
    %v247 = vpop.permute.xlu0 %246
    %v249 = vadd.f32 %v239, %v247
    %v250 = vtanh.pop %v249
    %252 = vrot.lane.b32.xlu0 %v250, 32
    %v253 = vpop.permute.xlu0 %252
    %v255 = vmul.f32 %v233, %v253
    %v256 = vld [vmem:[#allocation2 + $0x1] sm:$0x1]
    %258 = vrot.lane.b32.xlu0 %v255, 64
    %v259 = vpop.permute.xlu0 %258
    %v260 = vsel %vm72, %v259, 0
    %262 = vmatprep.subr.mxu0 0.0
    %263 = vmatpush1.msra.mxu0 %v147
    %264 = vmatprep.subr.mxu0 0.0
    %265 = vmatpush1.msra.mxu0 %v148
    %266 = vmatprep.subr.mxu0 0.0
    %267 = vmatpush1.msra.mxu0 %v149
    %268 = vmatprep.subr.mxu0 0.0
    %269 = vmatpush1.msra.mxu0 %v150
    %270 = vmatprep.subr.mxu0 0.0
    %271 = vmatpush1.msra.mxu0 0.0
    %272 = vmatprep.subr.mxu0 0.0
    %273 = vmatpush1.msra.mxu0 0.0
    %274 = vmatprep.subr.mxu0 0.0
    %275 = vmatpush1.msra.mxu0 0.0
    %276 = vmatprep.subr.mxu0 0.0
    %277 = vmatpush1.msra.mxu0 0.0
    %278 = vmatprep.subr.mxu0 0.0
    %279 = vmatpush1.msra.mxu0 0.0
    %280 = vmatprep.subr.mxu0 0.0
    %281 = vmatpush1.msra.mxu0 0.0
    %282 = vmatprep.subr.mxu0 0.0
    %283 = vmatpush1.msra.mxu0 0.0
    %284 = vmatprep.subr.mxu0 0.0
    %285 = vmatpush1.msra.mxu0 0.0
    %286 = vmatprep.subr.mxu0 0.0
    %287 = vmatpush1.msra.mxu0 0.0
    %288 = vmatprep.subr.mxu0 0.0
    %289 = vmatpush1.msra.mxu0 0.0
    %290 = vmatprep.subr.mxu0 0.0
    %291 = vmatpush1.msra.mxu0 0.0
    %292 = vmatprep.subr.mxu0 0.0
    %293 = vmatpush1.msra.mxu0 0.0
    %294 = vmatprep.subr.mxu0 0.0
    %295 = vmatpush1.msra.mxu0 0.0
    %296 = vmatprep.subr.mxu0 0.0
    %297 = vmatpush1.msra.mxu0 0.0
    %298 = vmatprep.subr.mxu0 0.0
    %299 = vmatpush1.msra.mxu0 0.0
    %300 = vmatprep.subr.mxu0 0.0
    %301 = vmatpush1.msra.mxu0 0.0
    %302 = vmatprep.subr.mxu0 0.0
    %303 = vmatpush1.msra.mxu0 0.0
    %304 = vmatprep.subr.mxu0 0.0
    %305 = vmatpush1.msra.mxu0 0.0
    %306 = vmatprep.subr.mxu0 0.0
    %307 = vmatpush1.msra.mxu0 0.0
    %308 = vmatprep.subr.mxu0 0.0
    %309 = vmatpush1.msra.mxu0 0.0
    %310 = vmatprep.subr.mxu0 0.0
    %311 = vmatpush1.msra.mxu0 0.0
    %312 = vmatprep.subr.mxu0 0.0
    %313 = vmatpush1.msra.mxu0 0.0
    %314 = vmatprep.subr.mxu0 0.0
    %315 = vmatpush1.msra.mxu0 0.0
    %316 = vmatprep.subr.mxu0 0.0
    %317 = vmatpush1.msra.mxu0 0.0
    %318 = vmatprep.subr.mxu0 0.0
    %319 = vmatpush1.msra.mxu0 0.0
    %320 = vmatprep.subr.mxu0 0.0
    %321 = vmatpush1.msra.mxu0 0.0
    %322 = vmatprep.subr.mxu0 0.0
    %323 = vmatpush1.msra.mxu0 0.0
    %324 = vmatprep.subr.mxu0 0.0
    %325 = vmatpush1.msra.mxu0 0.0
    %326 = vmatprep.mubr.f32.mxu0 0.0
    %327 = vmatmul.mubr.f32.gmra.mrb[0].mxu0 %v260
    %v328 = vpop.f32.mrb[0].mxu0
    %v329 = vadd.f32 0.0, %v328
    %v330 = vpop.f32.mrb[0].mxu0
    %331 = vdwg.mxu0
    %v332 = vadd.f32 %v256, %v329
    %v333 = vxor.u32 %v332, 2147483648
    %v334 = vmul.f32 %v333, 1.442695
    %v335 = vpow.pop %v334
    %v336 = vadd.f32 %v335, 1.0
    %v337 = vrcp.pop %v336
    %v338 = vmul.f32 1.0, %v337
    %v339 = vtanh.pop %v332
    %v340 = vmul.f32 %v338, %v249
    %342 = vrot.lane.b32.xlu0 %v339, 32
    %v343 = vpop.permute.xlu0 %342
    %v345 = vmul.f32 %v338, %v343
    %347 = vrot.lane.b32.xlu0 %v345, 32
    %v348 = vpop.permute.xlu0 %347
    %v350 = vadd.f32 %v340, %v348
    %v351 = vtanh.pop %v350
    %353 = vrot.lane.b32.xlu0 %v351, 32
    %v354 = vpop.permute.xlu0 %353
    %v356 = vmul.f32 %v338, %v354
    %v357 = vld [vmem:[#allocation2 + $0x2] sm:$0x1]
    %359 = vrot.lane.b32.xlu0 %v356, 64
    %v360 = vpop.permute.xlu0 %359
    %v361 = vsel %vm72, %v360, 0
    %363 = vmatprep.subr.mxu0 0.0
    %364 = vmatpush1.msra.mxu0 %v147
    %365 = vmatprep.subr.mxu0 0.0
    %366 = vmatpush1.msra.mxu0 %v148
    %367 = vmatprep.subr.mxu0 0.0
    %368 = vmatpush1.msra.mxu0 %v149
    %369 = vmatprep.subr.mxu0 0.0
    %370 = vmatpush1.msra.mxu0 %v150
    %371 = vmatprep.subr.mxu0 0.0
    %372 = vmatpush1.msra.mxu0 0.0
    %373 = vmatprep.subr.mxu0 0.0
    %374 = vmatpush1.msra.mxu0 0.0
    %375 = vmatprep.subr.mxu0 0.0
    %376 = vmatpush1.msra.mxu0 0.0
    %377 = vmatprep.subr.mxu0 0.0
    %378 = vmatpush1.msra.mxu0 0.0
    %379 = vmatprep.subr.mxu0 0.0
    %380 = vmatpush1.msra.mxu0 0.0
    %381 = vmatprep.subr.mxu0 0.0
    %382 = vmatpush1.msra.mxu0 0.0
    %383 = vmatprep.subr.mxu0 0.0
    %384 = vmatpush1.msra.mxu0 0.0
    %385 = vmatprep.subr.mxu0 0.0
    %386 = vmatpush1.msra.mxu0 0.0
    %387 = vmatprep.subr.mxu0 0.0
    %388 = vmatpush1.msra.mxu0 0.0
    %389 = vmatprep.subr.mxu0 0.0
    %390 = vmatpush1.msra.mxu0 0.0
    %391 = vmatprep.subr.mxu0 0.0
    %392 = vmatpush1.msra.mxu0 0.0
    %393 = vmatprep.subr.mxu0 0.0
    %394 = vmatpush1.msra.mxu0 0.0
    %395 = vmatprep.subr.mxu0 0.0
    %396 = vmatpush1.msra.mxu0 0.0
    %397 = vmatprep.subr.mxu0 0.0
    %398 = vmatpush1.msra.mxu0 0.0
    %399 = vmatprep.subr.mxu0 0.0
    %400 = vmatpush1.msra.mxu0 0.0
    %401 = vmatprep.subr.mxu0 0.0
    %402 = vmatpush1.msra.mxu0 0.0
    %403 = vmatprep.subr.mxu0 0.0
    %404 = vmatpush1.msra.mxu0 0.0
    %405 = vmatprep.subr.mxu0 0.0
    %406 = vmatpush1.msra.mxu0 0.0
    %407 = vmatprep.subr.mxu0 0.0
    %408 = vmatpush1.msra.mxu0 0.0
    %409 = vmatprep.subr.mxu0 0.0
    %410 = vmatpush1.msra.mxu0 0.0
    %411 = vmatprep.subr.mxu0 0.0
    %412 = vmatpush1.msra.mxu0 0.0
    %413 = vmatprep.subr.mxu0 0.0
    %414 = vmatpush1.msra.mxu0 0.0
    %415 = vmatprep.subr.mxu0 0.0
    %416 = vmatpush1.msra.mxu0 0.0
    %417 = vmatprep.subr.mxu0 0.0
    %418 = vmatpush1.msra.mxu0 0.0
    %419 = vmatprep.subr.mxu0 0.0
    %420 = vmatpush1.msra.mxu0 0.0
    %421 = vmatprep.subr.mxu0 0.0
    %422 = vmatpush1.msra.mxu0 0.0
    %423 = vmatprep.subr.mxu0 0.0
    %424 = vmatpush1.msra.mxu0 0.0
    %425 = vmatprep.subr.mxu0 0.0
    %426 = vmatpush1.msra.mxu0 0.0
    %427 = vmatprep.mubr.f32.mxu0 0.0
    %428 = vmatmul.mubr.f32.gmra.mrb[0].mxu0 %v361
    %v429 = vpop.f32.mrb[0].mxu0
    %v430 = vadd.f32 0.0, %v429
    %v431 = vpop.f32.mrb[0].mxu0
    %432 = vdwg.mxu0
    %v433 = vadd.f32 %v357, %v430
    %v434 = vxor.u32 %v433, 2147483648
    %v435 = vmul.f32 %v434, 1.442695
    %v436 = vpow.pop %v435
    %v437 = vadd.f32 %v436, 1.0
    %v438 = vrcp.pop %v437
    %v439 = vmul.f32 1.0, %v438
    %v440 = vtanh.pop %v433
    %v441 = vmul.f32 %v439, %v350
    %443 = vrot.lane.b32.xlu0 %v440, 32
    %v444 = vpop.permute.xlu0 %443
    %v446 = vmul.f32 %v439, %v444
    %448 = vrot.lane.b32.xlu0 %v446, 32
    %v449 = vpop.permute.xlu0 %448
    %v451 = vadd.f32 %v441, %v449
    %v452 = vtanh.pop %v451
    %454 = vrot.lane.b32.xlu0 %v452, 32
    %v455 = vpop.permute.xlu0 %454
    %v457 = vmul.f32 %v439, %v455
    %v458 = vld [vmem:[#allocation2 + $0x3] sm:$0x1]
    %460 = vrot.lane.b32.xlu0 %v457, 64
    %v461 = vpop.permute.xlu0 %460
    %v462 = vsel %vm72, %v461, 0
    %464 = vmatprep.subr.mxu0 0.0
    %465 = vmatpush1.msra.mxu0 %v147
    %466 = vmatprep.subr.mxu0 0.0
    %467 = vmatpush1.msra.mxu0 %v148
    %468 = vmatprep.subr.mxu0 0.0
    %469 = vmatpush1.msra.mxu0 %v149
    %470 = vmatprep.subr.mxu0 0.0
    %471 = vmatpush1.msra.mxu0 %v150
    %472 = vmatprep.subr.mxu0 0.0
    %473 = vmatpush1.msra.mxu0 0.0
    %474 = vmatprep.subr.mxu0 0.0
    %475 = vmatpush1.msra.mxu0 0.0
    %476 = vmatprep.subr.mxu0 0.0
    %477 = vmatpush1.msra.mxu0 0.0
    %478 = vmatprep.subr.mxu0 0.0
    %479 = vmatpush1.msra.mxu0 0.0
    %480 = vmatprep.subr.mxu0 0.0
    %481 = vmatpush1.msra.mxu0 0.0
    %482 = vmatprep.subr.mxu0 0.0
    %483 = vmatpush1.msra.mxu0 0.0
    %484 = vmatprep.subr.mxu0 0.0
    %485 = vmatpush1.msra.mxu0 0.0
    %486 = vmatprep.subr.mxu0 0.0
    %487 = vmatpush1.msra.mxu0 0.0
    %488 = vmatprep.subr.mxu0 0.0
    %489 = vmatpush1.msra.mxu0 0.0
    %490 = vmatprep.subr.mxu0 0.0
    %491 = vmatpush1.msra.mxu0 0.0
    %492 = vmatprep.subr.mxu0 0.0
    %493 = vmatpush1.msra.mxu0 0.0
    %494 = vmatprep.subr.mxu0 0.0
    %495 = vmatpush1.msra.mxu0 0.0
    %496 = vmatprep.subr.mxu0 0.0
    %497 = vmatpush1.msra.mxu0 0.0
    %498 = vmatprep.subr.mxu0 0.0
    %499 = vmatpush1.msra.mxu0 0.0
    %500 = vmatprep.subr.mxu0 0.0
    %501 = vmatpush1.msra.mxu0 0.0
    %502 = vmatprep.subr.mxu0 0.0
    %503 = vmatpush1.msra.mxu0 0.0
    %504 = vmatprep.subr.mxu0 0.0
    %505 = vmatpush1.msra.mxu0 0.0
    %506 = vmatprep.subr.mxu0 0.0
    %507 = vmatpush1.msra.mxu0 0.0
    %508 = vmatprep.subr.mxu0 0.0
    %509 = vmatpush1.msra.mxu0 0.0
    %510 = vmatprep.subr.mxu0 0.0
    %511 = vmatpush1.msra.mxu0 0.0
    %512 = vmatprep.subr.mxu0 0.0
    %513 = vmatpush1.msra.mxu0 0.0
    %514 = vmatprep.subr.mxu0 0.0
    %515 = vmatpush1.msra.mxu0 0.0
    %516 = vmatprep.subr.mxu0 0.0
    %517 = vmatpush1.msra.mxu0 0.0
    %518 = vmatprep.subr.mxu0 0.0
    %519 = vmatpush1.msra.mxu0 0.0
    %520 = vmatprep.subr.mxu0 0.0
    %521 = vmatpush1.msra.mxu0 0.0
    %522 = vmatprep.subr.mxu0 0.0
    %523 = vmatpush1.msra.mxu0 0.0
    %524 = vmatprep.subr.mxu0 0.0
    %525 = vmatpush1.msra.mxu0 0.0
    %526 = vmatprep.subr.mxu0 0.0
    %527 = vmatpush1.msra.mxu0 0.0
    %528 = vmatprep.mubr.f32.mxu0 0.0
    %529 = vmatmul.mubr.f32.gmra.mrb[0].mxu0 %v462
    %v530 = vpop.f32.mrb[0].mxu0
    %v531 = vadd.f32 0.0, %v530
    %v532 = vpop.f32.mrb[0].mxu0
    %533 = vdwg.mxu0
    %v534 = vadd.f32 %v458, %v531
    %v535 = vxor.u32 %v534, 2147483648
    %v536 = vmul.f32 %v535, 1.442695
    %v537 = vpow.pop %v536
    %v538 = vadd.f32 %v537, 1.0
    %v539 = vrcp.pop %v538
    %v540 = vmul.f32 1.0, %v539
    %v541 = vtanh.pop %v534
    %v542 = vmul.f32 %v540, %v451
    %544 = vrot.lane.b32.xlu0 %v541, 32
    %v545 = vpop.permute.xlu0 %544
    %v547 = vmul.f32 %v540, %v545
    %549 = vrot.lane.b32.xlu0 %v547, 32
    %v550 = vpop.permute.xlu0 %549
    %v552 = vadd.f32 %v542, %v550
    %v553 = vtanh.pop %v552
    %555 = vrot.lane.b32.xlu0 %v553, 32
    %v556 = vpop.permute.xlu0 %555
    %v558 = vmul.f32 %v540, %v556
    %v559 = vld [vmem:[#allocation2 + $0x4] sm:$0x1]
    %561 = vrot.lane.b32.xlu0 %v558, 64
    %v562 = vpop.permute.xlu0 %561
    %v563 = vsel %vm72, %v562, 0
    %565 = vmatprep.subr.mxu0 0.0
    %566 = vmatpush1.msra.mxu0 %v147
    %567 = vmatprep.subr.mxu0 0.0
    %568 = vmatpush1.msra.mxu0 %v148
    %569 = vmatprep.subr.mxu0 0.0
    %570 = vmatpush1.msra.mxu0 %v149
    %571 = vmatprep.subr.mxu0 0.0
    %572 = vmatpush1.msra.mxu0 %v150
    %573 = vmatprep.subr.mxu0 0.0
    %574 = vmatpush1.msra.mxu0 0.0
    %575 = vmatprep.subr.mxu0 0.0
    %576 = vmatpush1.msra.mxu0 0.0
    %577 = vmatprep.subr.mxu0 0.0
    %578 = vmatpush1.msra.mxu0 0.0
    %579 = vmatprep.subr.mxu0 0.0
    %580 = vmatpush1.msra.mxu0 0.0
    %581 = vmatprep.subr.mxu0 0.0
    %582 = vmatpush1.msra.mxu0 0.0
    %583 = vmatprep.subr.mxu0 0.0
    %584 = vmatpush1.msra.mxu0 0.0
    %585 = vmatprep.subr.mxu0 0.0
    %586 = vmatpush1.msra.mxu0 0.0
    %587 = vmatprep.subr.mxu0 0.0
    %588 = vmatpush1.msra.mxu0 0.0
    %589 = vmatprep.subr.mxu0 0.0
    %590 = vmatpush1.msra.mxu0 0.0
    %591 = vmatprep.subr.mxu0 0.0
    %592 = vmatpush1.msra.mxu0 0.0
    %593 = vmatprep.subr.mxu0 0.0
    %594 = vmatpush1.msra.mxu0 0.0
    %595 = vmatprep.subr.mxu0 0.0
    %596 = vmatpush1.msra.mxu0 0.0
    %597 = vmatprep.subr.mxu0 0.0
    %598 = vmatpush1.msra.mxu0 0.0
    %599 = vmatprep.subr.mxu0 0.0
    %600 = vmatpush1.msra.mxu0 0.0
    %601 = vmatprep.subr.mxu0 0.0
    %602 = vmatpush1.msra.mxu0 0.0
    %603 = vmatprep.subr.mxu0 0.0
    %604 = vmatpush1.msra.mxu0 0.0
    %605 = vmatprep.subr.mxu0 0.0
    %606 = vmatpush1.msra.mxu0 0.0
    %607 = vmatprep.subr.mxu0 0.0
    %608 = vmatpush1.msra.mxu0 0.0
    %609 = vmatprep.subr.mxu0 0.0
    %610 = vmatpush1.msra.mxu0 0.0
    %611 = vmatprep.subr.mxu0 0.0
    %612 = vmatpush1.msra.mxu0 0.0
    %613 = vmatprep.subr.mxu0 0.0
    %614 = vmatpush1.msra.mxu0 0.0
    %615 = vmatprep.subr.mxu0 0.0
    %616 = vmatpush1.msra.mxu0 0.0
    %617 = vmatprep.subr.mxu0 0.0
    %618 = vmatpush1.msra.mxu0 0.0
    %619 = vmatprep.subr.mxu0 0.0
    %620 = vmatpush1.msra.mxu0 0.0
    %621 = vmatprep.subr.mxu0 0.0
    %622 = vmatpush1.msra.mxu0 0.0
    %623 = vmatprep.subr.mxu0 0.0
    %624 = vmatpush1.msra.mxu0 0.0
    %625 = vmatprep.subr.mxu0 0.0
    %626 = vmatpush1.msra.mxu0 0.0
    %627 = vmatprep.subr.mxu0 0.0
    %628 = vmatpush1.msra.mxu0 0.0
    %629 = vmatprep.mubr.f32.mxu0 0.0
    %630 = vmatmul.mubr.f32.gmra.mrb[0].mxu0 %v563
    %v631 = vpop.f32.mrb[0].mxu0
    %v632 = vadd.f32 0.0, %v631
    %v633 = vpop.f32.mrb[0].mxu0
    %634 = vdwg.mxu0
    %v635 = vadd.f32 %v559, %v632
    %v636 = vxor.u32 %v635, 2147483648
    %v637 = vmul.f32 %v636, 1.442695
    %v638 = vpow.pop %v637
    %v639 = vadd.f32 %v638, 1.0
    %v640 = vrcp.pop %v639
    %v641 = vmul.f32 1.0, %v640
    %v642 = vtanh.pop %v635
    %v643 = vmul.f32 %v641, %v552
    %645 = vrot.lane.b32.xlu0 %v642, 32
    %v646 = vpop.permute.xlu0 %645
    %v648 = vmul.f32 %v641, %v646
    %650 = vrot.lane.b32.xlu0 %v648, 32
    %v651 = vpop.permute.xlu0 %650
    %v653 = vadd.f32 %v643, %v651
    %v654 = vtanh.pop %v653
    %656 = vrot.lane.b32.xlu0 %v654, 32
    %v657 = vpop.permute.xlu0 %656
    %v659 = vmul.f32 %v641, %v657
    %v660 = vld [vmem:[#allocation2 + $0x5] sm:$0x1]
    %662 = vrot.lane.b32.xlu0 %v659, 64
    %v663 = vpop.permute.xlu0 %662
    %v664 = vsel %vm72, %v663, 0
    %666 = vmatprep.subr.mxu0 0.0
    %667 = vmatpush1.msra.mxu0 %v147
    %668 = vmatprep.subr.mxu0 0.0
    %669 = vmatpush1.msra.mxu0 %v148
    %670 = vmatprep.subr.mxu0 0.0
    %671 = vmatpush1.msra.mxu0 %v149
    %672 = vmatprep.subr.mxu0 0.0
    %673 = vmatpush1.msra.mxu0 %v150
    %674 = vmatprep.subr.mxu0 0.0
    %675 = vmatpush1.msra.mxu0 0.0
    %676 = vmatprep.subr.mxu0 0.0
    %677 = vmatpush1.msra.mxu0 0.0
    %678 = vmatprep.subr.mxu0 0.0
    %679 = vmatpush1.msra.mxu0 0.0
    %680 = vmatprep.subr.mxu0 0.0
    %681 = vmatpush1.msra.mxu0 0.0
    %682 = vmatprep.subr.mxu0 0.0
    %683 = vmatpush1.msra.mxu0 0.0
    %684 = vmatprep.subr.mxu0 0.0
    %685 = vmatpush1.msra.mxu0 0.0
    %686 = vmatprep.subr.mxu0 0.0
    %687 = vmatpush1.msra.mxu0 0.0
    %688 = vmatprep.subr.mxu0 0.0
    %689 = vmatpush1.msra.mxu0 0.0
    %690 = vmatprep.subr.mxu0 0.0
    %691 = vmatpush1.msra.mxu0 0.0
    %692 = vmatprep.subr.mxu0 0.0
    %693 = vmatpush1.msra.mxu0 0.0
    %694 = vmatprep.subr.mxu0 0.0
    %695 = vmatpush1.msra.mxu0 0.0
    %696 = vmatprep.subr.mxu0 0.0
    %697 = vmatpush1.msra.mxu0 0.0
    %698 = vmatprep.subr.mxu0 0.0
    %699 = vmatpush1.msra.mxu0 0.0
    %700 = vmatprep.subr.mxu0 0.0
    %701 = vmatpush1.msra.mxu0 0.0
    %702 = vmatprep.subr.mxu0 0.0
    %703 = vmatpush1.msra.mxu0 0.0
    %704 = vmatprep.subr.mxu0 0.0
    %705 = vmatpush1.msra.mxu0 0.0
    %706 = vmatprep.subr.mxu0 0.0
    %707 = vmatpush1.msra.mxu0 0.0
    %708 = vmatprep.subr.mxu0 0.0
    %709 = vmatpush1.msra.mxu0 0.0
    %710 = vmatprep.subr.mxu0 0.0
    %711 = vmatpush1.msra.mxu0 0.0
    %712 = vmatprep.subr.mxu0 0.0
    %713 = vmatpush1.msra.mxu0 0.0
    %714 = vmatprep.subr.mxu0 0.0
    %715 = vmatpush1.msra.mxu0 0.0
    %716 = vmatprep.subr.mxu0 0.0
    %717 = vmatpush1.msra.mxu0 0.0
    %718 = vmatprep.subr.mxu0 0.0
    %719 = vmatpush1.msra.mxu0 0.0
    %720 = vmatprep.subr.mxu0 0.0
    %721 = vmatpush1.msra.mxu0 0.0
    %722 = vmatprep.subr.mxu0 0.0
    %723 = vmatpush1.msra.mxu0 0.0
    %724 = vmatprep.subr.mxu0 0.0
    %725 = vmatpush1.msra.mxu0 0.0
    %726 = vmatprep.subr.mxu0 0.0
    %727 = vmatpush1.msra.mxu0 0.0
    %728 = vmatprep.subr.mxu0 0.0
    %729 = vmatpush1.msra.mxu0 0.0
    %730 = vmatprep.mubr.f32.mxu0 0.0
    %731 = vmatmul.mubr.f32.gmra.mrb[0].mxu0 %v664
    %v732 = vpop.f32.mrb[0].mxu0
    %v733 = vadd.f32 0.0, %v732
    %v734 = vpop.f32.mrb[0].mxu0
    %735 = vdwg.mxu0
    %v736 = vadd.f32 %v660, %v733
    %v737 = vxor.u32 %v736, 2147483648
    %v738 = vmul.f32 %v737, 1.442695
    %v739 = vpow.pop %v738
    %v740 = vadd.f32 %v739, 1.0
    %v741 = vrcp.pop %v740
    %v742 = vmul.f32 1.0, %v741
    %v743 = vtanh.pop %v736
    %v744 = vmul.f32 %v742, %v653
    %746 = vrot.lane.b32.xlu0 %v743, 32
    %v747 = vpop.permute.xlu0 %746
    %v749 = vmul.f32 %v742, %v747
    %751 = vrot.lane.b32.xlu0 %v749, 32
    %v752 = vpop.permute.xlu0 %751
    %v754 = vadd.f32 %v744, %v752
    %v755 = vtanh.pop %v754
    %757 = vrot.lane.b32.xlu0 %v755, 32
    %v758 = vpop.permute.xlu0 %757
    %v760 = vmul.f32 %v742, %v758
    %v761 = vld [vmem:[#allocation2 + $0x6] sm:$0x1]
    %763 = vrot.lane.b32.xlu0 %v760, 64
    %v764 = vpop.permute.xlu0 %763
    %v765 = vsel %vm72, %v764, 0
    %767 = vmatprep.subr.mxu0 0.0
    %768 = vmatpush1.msra.mxu0 %v147
    %769 = vmatprep.subr.mxu0 0.0
    %770 = vmatpush1.msra.mxu0 %v148
    %771 = vmatprep.subr.mxu0 0.0
    %772 = vmatpush1.msra.mxu0 %v149
    %773 = vmatprep.subr.mxu0 0.0
    %774 = vmatpush1.msra.mxu0 %v150
    %775 = vmatprep.subr.mxu0 0.0
    %776 = vmatpush1.msra.mxu0 0.0
    %777 = vmatprep.subr.mxu0 0.0
    %778 = vmatpush1.msra.mxu0 0.0
    %779 = vmatprep.subr.mxu0 0.0
    %780 = vmatpush1.msra.mxu0 0.0
    %781 = vmatprep.subr.mxu0 0.0
    %782 = vmatpush1.msra.mxu0 0.0
    %783 = vmatprep.subr.mxu0 0.0
    %784 = vmatpush1.msra.mxu0 0.0
    %785 = vmatprep.subr.mxu0 0.0
    %786 = vmatpush1.msra.mxu0 0.0
    %787 = vmatprep.subr.mxu0 0.0
    %788 = vmatpush1.msra.mxu0 0.0
    %789 = vmatprep.subr.mxu0 0.0
    %790 = vmatpush1.msra.mxu0 0.0
    %791 = vmatprep.subr.mxu0 0.0
    %792 = vmatpush1.msra.mxu0 0.0
    %793 = vmatprep.subr.mxu0 0.0
    %794 = vmatpush1.msra.mxu0 0.0
    %795 = vmatprep.subr.mxu0 0.0
    %796 = vmatpush1.msra.mxu0 0.0
    %797 = vmatprep.subr.mxu0 0.0
    %798 = vmatpush1.msra.mxu0 0.0
    %799 = vmatprep.subr.mxu0 0.0
    %800 = vmatpush1.msra.mxu0 0.0
    %801 = vmatprep.subr.mxu0 0.0
    %802 = vmatpush1.msra.mxu0 0.0
    %803 = vmatprep.subr.mxu0 0.0
    %804 = vmatpush1.msra.mxu0 0.0
    %805 = vmatprep.subr.mxu0 0.0
    %806 = vmatpush1.msra.mxu0 0.0
    %807 = vmatprep.subr.mxu0 0.0
    %808 = vmatpush1.msra.mxu0 0.0
    %809 = vmatprep.subr.mxu0 0.0
    %810 = vmatpush1.msra.mxu0 0.0
    %811 = vmatprep.subr.mxu0 0.0
    %812 = vmatpush1.msra.mxu0 0.0
    %813 = vmatprep.subr.mxu0 0.0
    %814 = vmatpush1.msra.mxu0 0.0
    %815 = vmatprep.subr.mxu0 0.0
    %816 = vmatpush1.msra.mxu0 0.0
    %817 = vmatprep.subr.mxu0 0.0
    %818 = vmatpush1.msra.mxu0 0.0
    %819 = vmatprep.subr.mxu0 0.0
    %820 = vmatpush1.msra.mxu0 0.0
    %821 = vmatprep.subr.mxu0 0.0
    %822 = vmatpush1.msra.mxu0 0.0
    %823 = vmatprep.subr.mxu0 0.0
    %824 = vmatpush1.msra.mxu0 0.0
    %825 = vmatprep.subr.mxu0 0.0
    %826 = vmatpush1.msra.mxu0 0.0
    %827 = vmatprep.subr.mxu0 0.0
    %828 = vmatpush1.msra.mxu0 0.0
    %829 = vmatprep.subr.mxu0 0.0
    %830 = vmatpush1.msra.mxu0 0.0
    %831 = vmatprep.mubr.f32.mxu0 0.0
    %832 = vmatmul.mubr.f32.gmra.mrb[0].mxu0 %v765
    %v833 = vpop.f32.mrb[0].mxu0
    %v834 = vadd.f32 0.0, %v833
    %v835 = vpop.f32.mrb[0].mxu0
    %836 = vdwg.mxu0
    %v837 = vadd.f32 %v761, %v834
    %v838 = vxor.u32 %v837, 2147483648
    %v839 = vmul.f32 %v838, 1.442695
    %v840 = vpow.pop %v839
    %v841 = vadd.f32 %v840, 1.0
    %v842 = vrcp.pop %v841
    %v843 = vmul.f32 1.0, %v842
    %v844 = vtanh.pop %v837
    %v845 = vmul.f32 %v843, %v754
    %847 = vrot.lane.b32.xlu0 %v844, 32
    %v848 = vpop.permute.xlu0 %847
    %v850 = vmul.f32 %v843, %v848
    %852 = vrot.lane.b32.xlu0 %v850, 32
    %v853 = vpop.permute.xlu0 %852
    %v855 = vadd.f32 %v845, %v853
    %v856 = vtanh.pop %v855
    %858 = vrot.lane.b32.xlu0 %v856, 32
    %v859 = vpop.permute.xlu0 %858
    %v861 = vmul.f32 %v843, %v859
    %v862 = vld [vmem:[#allocation2 + $0x7] sm:$0x1]
    %864 = vrot.lane.b32.xlu0 %v861, 64
    %v865 = vpop.permute.xlu0 %864
    %v866 = vsel %vm72, %v865, 0
    %868 = vmatprep.subr.mxu0 0.0
    %869 = vmatpush1.msra.mxu0 %v147
    %870 = vmatprep.subr.mxu0 0.0
    %871 = vmatpush1.msra.mxu0 %v148
    %872 = vmatprep.subr.mxu0 0.0
    %873 = vmatpush1.msra.mxu0 %v149
    %874 = vmatprep.subr.mxu0 0.0
    %875 = vmatpush1.msra.mxu0 %v150
    %876 = vmatprep.subr.mxu0 0.0
    %877 = vmatpush1.msra.mxu0 0.0
    %878 = vmatprep.subr.mxu0 0.0
    %879 = vmatpush1.msra.mxu0 0.0
    %880 = vmatprep.subr.mxu0 0.0
    %881 = vmatpush1.msra.mxu0 0.0
    %882 = vmatprep.subr.mxu0 0.0
    %883 = vmatpush1.msra.mxu0 0.0
    %884 = vmatprep.subr.mxu0 0.0
    %885 = vmatpush1.msra.mxu0 0.0
    %886 = vmatprep.subr.mxu0 0.0
    %887 = vmatpush1.msra.mxu0 0.0
    %888 = vmatprep.subr.mxu0 0.0
    %889 = vmatpush1.msra.mxu0 0.0
    %890 = vmatprep.subr.mxu0 0.0
    %891 = vmatpush1.msra.mxu0 0.0
    %892 = vmatprep.subr.mxu0 0.0
    %893 = vmatpush1.msra.mxu0 0.0
    %894 = vmatprep.subr.mxu0 0.0
    %895 = vmatpush1.msra.mxu0 0.0
    %896 = vmatprep.subr.mxu0 0.0
    %897 = vmatpush1.msra.mxu0 0.0
    %898 = vmatprep.subr.mxu0 0.0
    %899 = vmatpush1.msra.mxu0 0.0
    %900 = vmatprep.subr.mxu0 0.0
    %901 = vmatpush1.msra.mxu0 0.0
    %902 = vmatprep.subr.mxu0 0.0
    %903 = vmatpush1.msra.mxu0 0.0
    %904 = vmatprep.subr.mxu0 0.0
    %905 = vmatpush1.msra.mxu0 0.0
    %906 = vmatprep.subr.mxu0 0.0
    %907 = vmatpush1.msra.mxu0 0.0
    %908 = vmatprep.subr.mxu0 0.0
    %909 = vmatpush1.msra.mxu0 0.0
    %910 = vmatprep.subr.mxu0 0.0
    %911 = vmatpush1.msra.mxu0 0.0
    %912 = vmatprep.subr.mxu0 0.0
    %913 = vmatpush1.msra.mxu0 0.0
    %914 = vmatprep.subr.mxu0 0.0
    %915 = vmatpush1.msra.mxu0 0.0
    %916 = vmatprep.subr.mxu0 0.0
    %917 = vmatpush1.msra.mxu0 0.0
    %918 = vmatprep.subr.mxu0 0.0
    %919 = vmatpush1.msra.mxu0 0.0
    %920 = vmatprep.subr.mxu0 0.0
    %921 = vmatpush1.msra.mxu0 0.0
    %922 = vmatprep.subr.mxu0 0.0
    %923 = vmatpush1.msra.mxu0 0.0
    %924 = vmatprep.subr.mxu0 0.0
    %925 = vmatpush1.msra.mxu0 0.0
    %926 = vmatprep.subr.mxu0 0.0
    %927 = vmatpush1.msra.mxu0 0.0
    %928 = vmatprep.subr.mxu0 0.0
    %929 = vmatpush1.msra.mxu0 0.0
    %930 = vmatprep.subr.mxu0 0.0
    %931 = vmatpush1.msra.mxu0 0.0
    %932 = vmatprep.mubr.f32.mxu0 0.0
    %933 = vmatmul.mubr.f32.gmra.mrb[0].mxu0 %v866
    %v934 = vpop.f32.mrb[0].mxu0
    %v935 = vadd.f32 0.0, %v934
    %v936 = vpop.f32.mrb[0].mxu0
    %937 = vdwg.mxu0
    %v938 = vadd.f32 %v862, %v935
    %v939 = vxor.u32 %v938, 2147483648
    %v940 = vmul.f32 %v939, 1.442695
    %v941 = vpow.pop %v940
    %v942 = vadd.f32 %v941, 1.0
    %v943 = vrcp.pop %v942
    %v944 = vmul.f32 1.0, %v943
    %v945 = vtanh.pop %v938
    %v946 = vmul.f32 %v944, %v855
    %948 = vrot.lane.b32.xlu0 %v945, 32
    %v949 = vpop.permute.xlu0 %948
    %v951 = vmul.f32 %v944, %v949
    %953 = vrot.lane.b32.xlu0 %v951, 32
    %v954 = vpop.permute.xlu0 %953
    %v956 = vadd.f32 %v946, %v954
    %v957 = vtanh.pop %v956
    %959 = vrot.lane.b32.xlu0 %v957, 32
    %v960 = vpop.permute.xlu0 %959
    %v962 = vmul.f32 %v944, %v960
    %v964 = vrot.slane %v956, 7
    %965 = vrot.lane.b32.xlu0 %v964, 32
    %v966 = vpop.permute.xlu0 %965
    %vm968 = vcmask 1040384
    %v969 = vsel %vm968, %v962, %v966
    %971 = vrot.lane.b32.xlu0 %v969, 64
    %v972 = vpop.permute.xlu0 %971
    %vm974 = vcmask 254976
    %975 = vst.msk [vmem:[#allocation9] sm:$0x3] %vm974, %v972
    // Predicated region
    $region34: #{tpu_custom_call.1} parent=1 // pred_check
      _
    $region35: #{tpu_custom_call.1} parent=1 // pred_check_branch
      %977 = sbr.rel (0) target = $region37
    $region36: #{tpu_custom_call.1} parent=1 // pred_region
      %s979 = ssub.s32 32, 32
      %980 = vsyncadd [#allocation5], %s979
      %s982 = sshll.u32 [#allocation9], 4
      %s983 = int_to_ptr.vmem [resolvable:$true] %s982
      %985 = dma.vmem_to_hbm [thread:$0]  %s983, 32, %s5, [#allocation5]
    $region37: #{tpu_custom_call.1} parent=1 // pred_fallthru
      _
    // Predicated region
    $region38: #{tpu_custom_call.1} parent=1 // pred_check
      _
    $region39: #{tpu_custom_call.1} parent=1 // pred_check_branch
      %987 = sbr.rel (0) target = $region41
    $region40: #{tpu_custom_call.1} parent=1 // pred_region
      %988 = dma.done [#allocation5], 32
    $region41: #{tpu_custom_call.1} parent=1 // pred_fallthru
      _
    %989 = vsyncpa [#allocation4], 1
    %990 = vsyncpa [#allocation7], 1
    %991 = vsyncpa [#allocation5], 1

</llo_original>
